<compile_context>
chip_gen: v7x
topology: tpu7x:2x2x1
jax: 0.10.0
libtpu: 0.0.40
codegen_flags: <defaults>
</compile_context>

<pallas_src>
import math

import numpy as np

import jax
import jax.numpy as jnp
from jax.experimental import pallas as pl
from jax.experimental.pallas import tpu as pltpu


_LANE = 128
_MIB = 1024 * 1024


def _cdiv(a: int, b: int) -> int:
    return -(-a // b)


def _round_up(x: int, m: int) -> int:
    return _cdiv(x, m) * m


def _pick_row_fold(input_size: int, hidden_size: int) -> int:
    """Rows folded into the lane axis so both K and N are >= 128 lanes."""
    if input_size >= _LANE and hidden_size >= _LANE:
        return 1
    return max(_cdiv(_LANE, input_size), _cdiv(_LANE, hidden_size), 1)


def build_blockdiag_weight(weight, row_fold: int, dtype):
    """[groups, ws, hg] -> block-diagonal [row_fold*input, row_fold*hidden].

    One MXU matmul against this matrix reproduces the grouped einsum: group g
    of (folded) row j only meets weight[g] on the diagonal; all other blocks
    are zero (zero FLOPs are free — the MXU pads K/N internally anyway).
    Built once (wrapper / __init__); tiny compared to the activations.
    """
    g, ws, hg = weight.shape
    K, N = g * ws, g * hg
    w = jnp.zeros((row_fold * K, row_fold * N), dtype=dtype)
    wc = weight.astype(dtype)
    for j in range(row_fold):
        for i in range(g):
            w = w.at[j * K + i * ws:j * K + (i + 1) * ws,
                     j * N + i * hg:j * N + (i + 1) * hg].set(wc[i])
    return w


def _vmem_cap_bytes() -> int:
    try:
        info = pltpu.get_tpu_info()
        cap = getattr(info, "vmem_capacity_bytes", None)
        if cap:
            return int(cap)
    except Exception:
        pass
    return 64 * _MIB  # conservative fallback: v7x per-TensorCore VMEM


# ----------------------------------------------------------------------------
# Pallas kernel
# ----------------------------------------------------------------------------
def _grouped_linear_kernel(x_ref, w_ref, o_ref):
    """x_ref: [TM, K], w_ref: [K, N] (block-diagonal), o_ref: [TM, N]."""
    # One MXU matmul, f32 accumulation, one cast, one lane-dense store.
    o_ref[...] = jnp.dot(
        x_ref[...], w_ref[...], preferred_element_type=jnp.float32
    ).astype(o_ref.dtype)


# ----------------------------------------------------------------------------
# Wrapper
# ----------------------------------------------------------------------------
def grouped_linear_einsum(x, weight, *, tm: int = 2048,
                          block_diag_weight=None, row_fold=None):
    """x: [b, t, input_size], weight: [groups, ws, hidden_size//groups]."""
    b, t, input_size = x.shape
    groups, ws, hg = weight.shape
    assert input_size == groups * ws, (input_size, groups, ws)
    hidden_size = groups * hg

    r = _pick_row_fold(input_size, hidden_size) if row_fold is None else row_fold
    if block_diag_weight is None:
        block_diag_weight = build_blockdiag_weight(weight, r, x.dtype)
    w = block_diag_weight
    K, N = r * input_size, r * hidden_size
    assert w.shape == (K, N) and w.dtype == x.dtype, (w.shape, w.dtype, x.dtype)

    n = b * t
    x2 = x.reshape(n, input_size)                  # free (contiguous)

    # Row folding needs n % r == 0; also keep at least 8 folded rows.
    n_pad = _round_up(n, r)
    if n_pad // r < 8:
        n_pad = _round_up(n, 8 * r)
    if n_pad != n:
        x2 = jnp.pad(x2, ((0, n_pad - n), (0, 0)))
    nf = n_pad // r
    xf = x2.reshape(nf, K)                          # free (contiguous)

    itemsize = jnp.dtype(x.dtype).itemsize

    # Row tile: big (this op is HBM-bound; ~0.35us per grid step), sublane/MXU
    # friendly, capped by the problem size.
    if tm >= nf:
        tm_eff = nf                                 # single step, block == rows
    else:
        tm_eff = max(8, (tm // 8) * 8)
    if nf >= 1024 and _cdiv(nf, tm_eff) < 2:
        # Keep >=2 grid steps so both v7x TensorCores get work.
        tm_eff = _round_up(_cdiv(nf, 2), 256)
    # Keep the (double-buffered) tile footprint inside the VMEM budget.
    cap = int(_vmem_cap_bytes() * 3 // 4)           # headroom for Mosaic scratch
    budget = cap - 8 * _MIB
    while tm_eff > 256 and (2 * tm_eff * (K + N) + K * N) * itemsize > budget:
        tm_eff = max(256, _round_up(tm_eff // 2, 256))
    grid = (_cdiv(nf, tm_eff),)

    est = (2 * tm_eff * (K + N) + K * N) * itemsize
    vmem_limit = int(min(max(est + 16 * _MIB, 32 * _MIB), cap))

    cost = pl.CostEstimate(
        flops=2 * nf * K * N,
        transcendentals=0,
        bytes_accessed=int((nf * (K + N) + K * N) * itemsize),
    )

    out = pl.pallas_call(
        _grouped_linear_kernel,
        out_shape=jax.ShapeDtypeStruct((nf, N), x.dtype),
        grid=grid,
        in_specs=[
            pl.BlockSpec((tm_eff, K), lambda i: (i, 0)),   # streamed row tiles
            pl.BlockSpec((K, N), lambda i: (0, 0)),        # resident weight
        ],
        out_specs=pl.BlockSpec((tm_eff, N), lambda i: (i, 0)),
        compiler_params=pltpu.CompilerParams(
            dimension_semantics=("parallel",),             # megacore shard (v7x)
            vmem_limit_bytes=vmem_limit,
        ),
        cost_estimate=cost,
    )(xf, w)

    out = out.reshape(n_pad, hidden_size)
    if n_pad != n:
        out = out[:n]
    return out.reshape(b, t, hidden_size)


class GroupedLinearEinsum:
    """JAX/Pallas port of the PyTorch module (forward pass only)."""

    def __init__(self, input_size: int, hidden_size: int, groups: int = 1,
                 *, key=None, dtype=jnp.float32):
        assert input_size % groups == 0, f"{input_size} % {groups}"
        assert hidden_size % groups == 0, f"{hidden_size} % {groups}"
        self.input_size = input_size
        self.hidden_size = hidden_size
        self.groups = groups
        self.ws = input_size // groups
        self.hg = hidden_size // groups
        if key is None:
            key = jax.random.PRNGKey(0)
        # kaiming_uniform_(a=sqrt(5))-style bound (demo init).
        bound = 1.0 / math.sqrt(self.ws)
        self.weight = jax.random.uniform(
            key, (groups, self.ws, self.hg), dtype, minval=-bound, maxval=bound)
        # Static layout decision + per-dtype block-diagonal weight cache
        # (hoisted out of the hot path).
        self.row_fold = _pick_row_fold(input_size, hidden_size)
        self._w_bd = {}

    def _block_diag(self, dtype):
        k = jnp.dtype(dtype).name
        if k not in self._w_bd:
            self._w_bd[k] = build_blockdiag_weight(self.weight, self.row_fold, dtype)
        return self._w_bd[k]

    def __call__(self, x):
        return grouped_linear_einsum(
            x, self.weight,
            block_diag_weight=self._block_diag(x.dtype),
            row_fold=self.row_fold)

    def __repr__(self):
        return (f"GroupedLinearEinsum(input_size: {self.input_size}, "
                f"hidden_size: {self.hidden_size}, groups: {self.groups})")


# ----------------------------------------------------------------------------
# Pure-JAX reference (mirrors the torch einsum) for correctness checks.
# ----------------------------------------------------------------------------
def _reference(x, weight):
    b, t, _ = x.shape
    g, ws, hg = weight.shape
    xg = x.reshape(b, t, g, ws)
    y = jnp.einsum("btgi,gih->btgh", xg, weight.astype(x.dtype))
    return y.reshape(b, t, g * hg)


if __name__ == "__main__":
    key = jax.random.PRNGKey(0)
    kx, kw, kx2, kw2 = jax.random.split(key, 4)

    # --- Case 1: demo shapes (narrow widths -> row folding engaged) ----------
    b, t, input_size, hidden_size, groups = 2, 16, 32, 64, 4
    mod = GroupedLinearEinsum(input_size, hidden_size, groups, key=kw)
    x = jax.random.normal(kx, (b, t, input_size), jnp.float32)

    out = jax.block_until_ready(mod(x))
    ref = _reference(x, mod.weight)
    assert out.shape == (b, t, hidden_size), out.shape
    np.testing.assert_allclose(np.asarray(out), np.asarray(ref),
                               rtol=1e-5, atol=1e-5)

    # bf16 path: native dtype through HBM, f32 MXU accumulation in-kernel.
    xb = x.astype(jnp.bfloat16)
    outb = jax.block_until_ready(mod(xb))
    refb = _reference(xb, mod.weight)
    np.testing.assert_allclose(np.asarray(outb, dtype=np.float32),
                               np.asarray(refb, dtype=np.float32),
                               rtol=2e-2, atol=2e-2)

    # --- Case 2: ragged row count (exercises the pad/unpad path) -------------
    b2, t2 = 3, 7                                    # n = 21, not a multiple of fold
    x3 = jax.random.normal(kx2, (b2, t2, input_size), jnp.float32)
    out3 = jax.block_until_ready(mod(x3))
    np.testing.assert_allclose(np.asarray(out3),
                               np.asarray(_reference(x3, mod.weight)),
                               rtol=1e-5, atol=1e-5)

    # --- Case 3: wide layer (no folding, row_fold == 1) -----------------------
    mod2 = GroupedLinearEinsum(256, 128, groups=2, key=kw2)
    x4 = jax.random.normal(kx, (2, 9, 256), jnp.float32)
    out4 = jax.block_until_ready(mod2(x4))
    np.testing.assert_allclose(np.asarray(out4),
                               np.asarray(_reference(x4, mod2.weight)),
                               rtol=1e-4, atol=1e-4)

    print("KERNEL_OK")
</pallas_src>

<mosaic_0001>
module attributes {stable_mosaic.version = 11 : i64} {
  func.func @_grouped_linear_kernel(%arg0: i32, %arg1: memref<8x128xf32, #tpu.memory_space<vmem>>, %arg2: memref<128x256xf32, #tpu.memory_space<vmem>>, %arg3: memref<8x256xf32, #tpu.memory_space<vmem>>) attributes {dimension_semantics = [#tpu.dimension_semantics<parallel>], iteration_bounds = array<i64: 1>, scalar_prefetch = 0 : i64, scratch_operands = 0 : i64, tpu.core_type = #tpu.core_type<tc>, window_params = [{transform_indices = @transform_0, window_bounds = array<i64: 8, 128>}, {pipeline_mode = #tpu.pipeline_mode<synchronous>, transform_indices = @transform_1, window_bounds = array<i64: 128, 256>}, {transform_indices = @transform_2, window_bounds = array<i64: 8, 256>}]} {
    %c0 = arith.constant 0 : index
    %c0_0 = arith.constant 0 : index
    %0 = vector.load %arg1[%c0, %c0_0] : memref<8x128xf32, #tpu.memory_space<vmem>>, vector<8x128xf32>
    %c0_1 = arith.constant 0 : index
    %c0_2 = arith.constant 0 : index
    %1 = vector.load %arg2[%c0_1, %c0_2] : memref<128x256xf32, #tpu.memory_space<vmem>>, vector<128x256xf32>
    %cst = arith.constant dense<0.000000e+00> : vector<8x256xf32>
    %2 = tpu.matmul %0, %1, %cst {dimension_numbers = #tpu.dot_dimension_numbers<[1], [0], [0], [1], [0, 0, 1, 1], [], []>} : vector<8x128xf32>, vector<128x256xf32>, vector<8x256xf32> -> vector<8x256xf32>
    %c0_3 = arith.constant 0 : index
    %c0_4 = arith.constant 0 : index
    %3 = vector.load %arg3[%c0_3, %c0_4] : memref<8x256xf32, #tpu.memory_space<vmem>>, vector<8x256xf32>
    tpu.vector_store %arg3[%c0_3, %c0_4], %2 {strides = array<i32>} : memref<8x256xf32, #tpu.memory_space<vmem>>, vector<8x256xf32>,
    return
  }
  func.func @transform_0(%arg0: i32) -> (i32, i32) {
    %c0_i32 = arith.constant 0 : i32
    %c0_i32_0 = arith.constant 0 : i32
    return %arg0, %c0_i32 : i32, i32
  }
  func.func @transform_1(%arg0: i32) -> (i32, i32) {
    %c0_i32 = arith.constant 0 : i32
    %c0_i32_0 = arith.constant 0 : i32
    %c0_i32_1 = arith.constant 0 : i32
    return %c0_i32, %c0_i32_0 : i32, i32
  }
  func.func @transform_2(%arg0: i32) -> (i32, i32) {
    %c0_i32 = arith.constant 0 : i32
    %c0_i32_0 = arith.constant 0 : i32
    return %arg0, %c0_i32 : i32, i32
  }
}

</mosaic_0001>

<llo_original>
// kernel: tpu_custom_call.1
$region0: #{tpu_custom_call.1}
  #allocation0 [shape = 'u32[]', space=smem, size = 0x4, offset = 0x4, fixed_abs, tag = 'smem constant byte address 0x4 - core index']
  #allocation1 [shape = 'u32[144,128]{1,0:T(1,128)}', space=vmem, size = 0x12000, scoped, tag = 'internal scratch']
  %s0 = inlined_call_operand.hbm [shape: f32[8,128], index: 0, kind: input, shape index: {}]
  %s1 = inlined_call_operand.hbm [shape: f32[128,256], index: 1, kind: input, shape index: {}]
  %s2 = inlined_call_operand.hbm [shape: f32[8,256], index: 2, kind: output, shape index: {}]
  %s3 = sld [smem:[#allocation0]]
  $region26: #{tpu_custom_call.1} parent=0
    _
  %s5 = ssub.s32 1, %s3
  %s6 = scalar_select 0, %s5, %s3
  $region1: #{tpu_custom_call.1} parent=0
    #allocation2 [shape = 'u8[4096]{0}', space=vmem, size = 0x1000, scoped, tag = 'input window, operand 0, single buffered']
    #allocation3 [shape = 's32[1]{0}', space=sflag, size = 0x4, scoped, tag = 'scoped memory for tpu_custom_call.1']
    #allocation4 [shape = 's32[1]{0}', space=sflag, size = 0x4, scoped, tag = 'scoped memory for tpu_custom_call.1']
    #allocation5 [shape = 'u8[131072]{0}', space=vmem, size = 0x20000, scoped, tag = 'input window, operand 1, single buffered']
    #allocation6 [shape = 's32[1]{0}', space=sflag, size = 0x4, scoped, tag = 'scoped memory for tpu_custom_call.1']
    #allocation7 [shape = 'u8[8192]{0}', space=vmem, size = 0x2000, scoped, tag = 'output window, operand 0, single buffered']
    %7 = vsyncpa [#allocation3], 0
    %8 = vsyncpa [#allocation6], 0
    %9 = vsyncpa [#allocation4], 0
    // Predicated region
    $region2: #{tpu_custom_call.1} parent=1 // pred_check
      _
    $region3: #{tpu_custom_call.1} parent=1 // pred_check_branch
      %11 = sbr.rel (0) target = $region5
    $region4: #{tpu_custom_call.1} parent=1 // pred_region
      %s13 = ssub.s32 128, 128
      %14 = vsyncadd [#allocation3], %s13
      %s16 = sshll.u32 [#allocation2], 4
      %s17 = int_to_ptr.vmem [resolvable:$true] %s16
      %19 = dma.hbm_to_vmem [thread:$0]  %s0, 128, %s17, [#allocation3]
    $region5: #{tpu_custom_call.1} parent=1 // pred_fallthru
      _
    // Predicated region
    $region6: #{tpu_custom_call.1} parent=1 // pred_check
      _
    $region7: #{tpu_custom_call.1} parent=1 // pred_check_branch
      %21 = sbr.rel (0) target = $region9
    $region8: #{tpu_custom_call.1} parent=1 // pred_region
      %s23 = ssub.s32 4096, 4096
      %24 = vsyncadd [#allocation6], %s23
      %s25 = sshll.u32 [#allocation5], 4
      %s26 = int_to_ptr.vmem [resolvable:$true] %s25
      %31 = dma.hbm_to_vmem [thread:$0]  %s1, 4096, %s26, [#allocation6], 256, 256, 16
    $region9: #{tpu_custom_call.1} parent=1 // pred_fallthru
      _
    // Predicated region
    $region10: #{tpu_custom_call.1} parent=1 // pred_check
      _
    $region11: #{tpu_custom_call.1} parent=1 // pred_check_branch
      %33 = sbr.rel (0) target = $region13
    $region12: #{tpu_custom_call.1} parent=1 // pred_region
      %34 = dma.done [#allocation3], 128
    $region13: #{tpu_custom_call.1} parent=1 // pred_fallthru
      _
    // Predicated region
    $region14: #{tpu_custom_call.1} parent=1 // pred_check
      _
    $region15: #{tpu_custom_call.1} parent=1 // pred_check_branch
      %36 = sbr.rel (0) target = $region17
    $region16: #{tpu_custom_call.1} parent=1 // pred_region
      %37 = dma.done [#allocation6], 4096
    $region17: #{tpu_custom_call.1} parent=1 // pred_fallthru
      _
    %v38 = vld [vmem:[#allocation2] sm:$0xff]
    %v39 = vld [vmem:[#allocation5] sm:$0xff]
    %v40 = vld [vmem:[#allocation5 + $0x8] sm:$0xff]
    %v41 = vld [vmem:[#allocation5 + $0x10] sm:$0xff]
    %v42 = vld [vmem:[#allocation5 + $0x18] sm:$0xff]
    %v43 = vld [vmem:[#allocation5 + $0x20] sm:$0xff]
    %v44 = vld [vmem:[#allocation5 + $0x28] sm:$0xff]
    %v45 = vld [vmem:[#allocation5 + $0x30] sm:$0xff]
    %v46 = vld [vmem:[#allocation5 + $0x38] sm:$0xff]
    %v47 = vld [vmem:[#allocation5 + $0x40] sm:$0xff]
    %v48 = vld [vmem:[#allocation5 + $0x48] sm:$0xff]
    %v49 = vld [vmem:[#allocation5 + $0x50] sm:$0xff]
    %v50 = vld [vmem:[#allocation5 + $0x58] sm:$0xff]
    %v51 = vld [vmem:[#allocation5 + $0x60] sm:$0xff]
    %v52 = vld [vmem:[#allocation5 + $0x68] sm:$0xff]
    %v53 = vld [vmem:[#allocation5 + $0x70] sm:$0xff]
    %v54 = vld [vmem:[#allocation5 + $0x78] sm:$0xff]
    %v55 = vld [vmem:[#allocation5 + $0x80] sm:$0xff]
    %v56 = vld [vmem:[#allocation5 + $0x88] sm:$0xff]
    %v57 = vld [vmem:[#allocation5 + $0x90] sm:$0xff]
    %v58 = vld [vmem:[#allocation5 + $0x98] sm:$0xff]
    %v59 = vld [vmem:[#allocation5 + $0xa0] sm:$0xff]
    %v60 = vld [vmem:[#allocation5 + $0xa8] sm:$0xff]
    %v61 = vld [vmem:[#allocation5 + $0xb0] sm:$0xff]
    %v62 = vld [vmem:[#allocation5 + $0xb8] sm:$0xff]
    %v63 = vld [vmem:[#allocation5 + $0xc0] sm:$0xff]
    %v64 = vld [vmem:[#allocation5 + $0xc8] sm:$0xff]
    %v65 = vld [vmem:[#allocation5 + $0xd0] sm:$0xff]
    %v66 = vld [vmem:[#allocation5 + $0xd8] sm:$0xff]
    %v67 = vld [vmem:[#allocation5 + $0xe0] sm:$0xff]
    %v68 = vld [vmem:[#allocation5 + $0xe8] sm:$0xff]
    %v69 = vld [vmem:[#allocation5 + $0xf0] sm:$0xff]
    %v70 = vld [vmem:[#allocation5 + $0xf8] sm:$0xff]
    %71 = vmatprep.subr.mxu0 %v40
    %72 = vmatpush1.msra.mxu0 %v39
    %73 = vmatprep.subr.mxu0 %v42
    %74 = vmatpush1.msra.mxu0 %v41
    %75 = vmatprep.subr.mxu0 %v44
    %76 = vmatpush1.msra.mxu0 %v43
    %77 = vmatprep.subr.mxu0 %v46
    %78 = vmatpush1.msra.mxu0 %v45
    %79 = vmatprep.subr.mxu0 %v48
    %80 = vmatpush1.msra.mxu0 %v47
    %81 = vmatprep.subr.mxu0 %v50
    %82 = vmatpush1.msra.mxu0 %v49
    %83 = vmatprep.subr.mxu0 %v52
    %84 = vmatpush1.msra.mxu0 %v51
    %85 = vmatprep.subr.mxu0 %v54
    %86 = vmatpush1.msra.mxu0 %v53
    %87 = vmatprep.subr.mxu0 %v56
    %88 = vmatpush1.msra.mxu0 %v55
    %89 = vmatprep.subr.mxu0 %v58
    %90 = vmatpush1.msra.mxu0 %v57
    %91 = vmatprep.subr.mxu0 %v60
    %92 = vmatpush1.msra.mxu0 %v59
    %93 = vmatprep.subr.mxu0 %v62
    %94 = vmatpush1.msra.mxu0 %v61
    %95 = vmatprep.subr.mxu0 %v64
    %96 = vmatpush1.msra.mxu0 %v63
    %97 = vmatprep.subr.mxu0 %v66
    %98 = vmatpush1.msra.mxu0 %v65
    %99 = vmatprep.subr.mxu0 %v68
    %100 = vmatpush1.msra.mxu0 %v67
    %101 = vmatprep.subr.mxu0 %v70
    %102 = vmatpush1.msra.mxu0 %v69
    %103 = vmatprep.subr.mxu0 0.0
    %104 = vmatpush1.msra.mxu0 0.0
    %105 = vmatprep.subr.mxu0 0.0
    %106 = vmatpush1.msra.mxu0 0.0
    %107 = vmatprep.subr.mxu0 0.0
    %108 = vmatpush1.msra.mxu0 0.0
    %109 = vmatprep.subr.mxu0 0.0
    %110 = vmatpush1.msra.mxu0 0.0
    %111 = vmatprep.subr.mxu0 0.0
    %112 = vmatpush1.msra.mxu0 0.0
    %113 = vmatprep.subr.mxu0 0.0
    %114 = vmatpush1.msra.mxu0 0.0
    %115 = vmatprep.subr.mxu0 0.0
    %116 = vmatpush1.msra.mxu0 0.0
    %117 = vmatprep.subr.mxu0 0.0
    %118 = vmatpush1.msra.mxu0 0.0
    %119 = vmatprep.subr.mxu0 0.0
    %120 = vmatpush1.msra.mxu0 0.0
    %121 = vmatprep.subr.mxu0 0.0
    %122 = vmatpush1.msra.mxu0 0.0
    %123 = vmatprep.subr.mxu0 0.0
    %124 = vmatpush1.msra.mxu0 0.0
    %125 = vmatprep.subr.mxu0 0.0
    %126 = vmatpush1.msra.mxu0 0.0
    %127 = vmatprep.subr.mxu0 0.0
    %128 = vmatpush1.msra.mxu0 0.0
    %129 = vmatprep.subr.mxu0 0.0
    %130 = vmatpush1.msra.mxu0 0.0
    %131 = vmatprep.subr.mxu0 0.0
    %132 = vmatpush1.msra.mxu0 0.0
    %133 = vmatprep.subr.mxu0 0.0
    %134 = vmatpush1.msra.mxu0 0.0
    %135 = vmatprep.mubr.f32.mxu0 0.0
    %136 = vmatmul.mubr.f32.gmra.mrb[0].mxu0 %v38
    %v137 = vpop.f32.mrb[0].mxu0
    %v138 = vadd.f32 0.0, %v137
    %v139 = vpop.f32.mrb[0].mxu0
    %v140 = vadd.f32 0.0, %v139
    %141 = vdwg.mxu0
    %142 = vst [vmem:[#allocation7] sm:$0xff] %v138
    %143 = vst [vmem:[#allocation7 + $0x8] sm:$0xff] %v140
    // Predicated region
    $region18: #{tpu_custom_call.1} parent=1 // pred_check
      _
    $region19: #{tpu_custom_call.1} parent=1 // pred_check_branch
      %145 = sbr.rel (0) target = $region21
    $region20: #{tpu_custom_call.1} parent=1 // pred_region
      %s147 = ssub.s32 256, 256
      %148 = vsyncadd [#allocation4], %s147
      %s150 = sshll.u32 [#allocation7], 4
      %s151 = int_to_ptr.vmem [resolvable:$true] %s150
      %153 = dma.vmem_to_hbm [thread:$0]  %s151, 256, %s2, [#allocation4]
    $region21: #{tpu_custom_call.1} parent=1 // pred_fallthru
      _
    // Predicated region
    $region22: #{tpu_custom_call.1} parent=1 // pred_check
      _
    $region23: #{tpu_custom_call.1} parent=1 // pred_check_branch
      %155 = sbr.rel (0) target = $region25
    $region24: #{tpu_custom_call.1} parent=1 // pred_region
      %156 = dma.done [#allocation4], 256
    $region25: #{tpu_custom_call.1} parent=1 // pred_fallthru
      _
    %157 = vsyncpa [#allocation3], 1
    %158 = vsyncpa [#allocation6], 1
    %159 = vsyncpa [#allocation4], 1

</llo_original>
